<compile_context>
chip_gen: v6e
topology: v6e:2x2x1
jax: 0.10.0
libtpu: 0.0.40
codegen_flags: <defaults>
</compile_context>

<pallas_src>
import jax
import jax.numpy as jnp
from jax import lax
from jax.experimental import pallas as pl
from jax.experimental.pallas import tpu as pltpu

NEG_SLOPE = 0.01   # nn.LeakyReLU default
BN_EPS = 1e-5      # nn.BatchNorm2d default eps


def _group9_kernel(x_ref, a1_ref, s1_ref, a2_ref, s2_ref, o_ref,
                   xp1_ref, xp2_ref):
    """Fused (conv3x3 + BN(eval) + LeakyReLU) x 2; B images per grid step.

    x_ref  : (B, H, W*Cin)        bf16 input images, lane-flattened NHWC
    a1_ref : (3, W*Cin,  W*Cout)  bf16 block-1 banded weights (BN scale folded)
    s1_ref : (1, W*Cout)          f32  block-1 shift (conv bias + BN folded)
    a2_ref : (3, W*Cout, W*Cout)  bf16 block-2 banded weights
    s2_ref : (1, W*Cout)          f32  block-2 shift
    o_ref  : (B, H, W*Cout)       f32  output, lane-flattened NHWC
    xp1_ref: (B*(H+2), W*Cin)     bf16 VMEM stacked row-padded block-1 input
    xp2_ref: (B*(H+2), W*Cout)    bf16 VMEM stacked row-padded block-1 act.
    """
    B, H = x_ref.shape[0], x_ref.shape[1]
    Hp = H + 2                 # per-image rows incl. top/bottom zero halos
    M = B * Hp - 2             # rows fed to each per-tap matmul

    # Zero ONLY the 2*B halo rows of each scratch (no full-buffer sweeps).
    z1 = jnp.zeros((1, xp1_ref.shape[1]), xp1_ref.dtype)
    z2 = jnp.zeros((1, xp2_ref.shape[1]), xp2_ref.dtype)
    for b in range(B):
        xp1_ref[b * Hp:b * Hp + 1, :] = z1
        xp1_ref[b * Hp + H + 1:b * Hp + H + 2, :] = z1
        xp2_ref[b * Hp:b * Hp + 1, :] = z2
        xp2_ref[b * Hp + H + 1:b * Hp + H + 2, :] = z2

    # ---- block 1: Conv3x3(pad=1) -> Dropout(eval=id) -> BN -> LeakyReLU ----
    for b in range(B):                                   # stack padded images
        xp1_ref[b * Hp + 1:b * Hp + 1 + H, :] = x_ref[b]

    acc = jnp.dot(xp1_ref[0:M, :], a1_ref[0],
                  preferred_element_type=jnp.float32)
    for dy in range(1, 3):                               # 3 MXU matmuls total
        acc = acc + jnp.dot(xp1_ref[dy:dy + M, :], a1_ref[dy],
                            preferred_element_type=jnp.float32)
    y1 = acc + s1_ref[...]                               # folded bias + BN
    y1 = jnp.where(y1 >= 0, y1, NEG_SLOPE * y1)          # LeakyReLU(0.01)
    y1 = y1.astype(xp2_ref.dtype)                        # bf16 for the MXU

    # ---- block 2 (input kept in VMEM, never hits HBM) ----
    for b in range(B):   # acc row r = conv output centered at padded row r+1
        xp2_ref[b * Hp + 1:b * Hp + 1 + H, :] = y1[b * Hp:b * Hp + H, :]

    acc2 = jnp.dot(xp2_ref[0:M, :], a2_ref[0],
                   preferred_element_type=jnp.float32)
    for dy in range(1, 3):
        acc2 = acc2 + jnp.dot(xp2_ref[dy:dy + M, :], a2_ref[dy],
                              preferred_element_type=jnp.float32)
    y2 = acc2 + s2_ref[...]
    y2 = jnp.where(y2 >= 0, y2, NEG_SLOPE * y2).astype(o_ref.dtype)

    for b in range(B):                                   # drop boundary rows
        o_ref[b] = y2[b * Hp:b * Hp + H, :]


def _fold_and_band(p, W):
    """Fold conv bias + BN(eval) into the weights/shift and build the banded
    (3, W*Cin, W*Cout) matmul weights for the lane-flattened layout.

    A[dy, i*Cin + ci, w*Cout + co] = (w_conv * bn_scale)[dy, i - w + 1, ci, co]
    when 0 <= i - w + 1 < 3, else 0 (zero-padded columns contribute 0).
    Weights are returned in bf16 (native MXU rate); the shift stays f32.
    """
    w, b = p["w"], p["b"]                                 # (3,3,Cin,Cout), (Cout,)
    scale = p["gamma"] / jnp.sqrt(p["var"] + BN_EPS)
    shift = p["beta"] + (b - p["mean"]) * scale           # conv-bias + BN folded
    w_f = w * scale                                       # BN scale into weights

    kh, kw, c_in, c_out = w.shape
    dx = jnp.arange(kw)[:, None, None]                    # (3,1,1)
    wi = jnp.arange(W)[None, :, None]                     # input column  i
    wo = jnp.arange(W)[None, None, :]                     # output column w
    one_hot = (wi == wo + dx - 1).astype(w_f.dtype)       # (3, W, W) band mask

    a = jnp.einsum("xiw,yxco->yicwo", one_hot, w_f)       # (3, W, Cin, W, Cout)
    a = a.reshape(kh, W * c_in, W * c_out).astype(jnp.bfloat16)
    s = jnp.tile(shift, W).reshape(1, W * c_out)          # [w*Cout+co] -> shift[co]
    return a, s.astype(jnp.float32)


def prepare_group9(params, W):
    """One-time (per weight update) folding + banding; hoisted out of forward."""
    a1, s1 = _fold_and_band(params["block1"], W)          # (3, W*Cin,  W*Cout)
    a2, s2 = _fold_and_band(params["block2"], W)          # (3, W*Cout, W*Cout)
    return dict(a1=a1, s1=s1, a2=a2, s2=s2)


def _pick_block_batch(n, h, target_rows=512):
    """Largest divisor of n with B*(H+2) <= target_rows: big MXU M, small VMEM."""
    b = max(1, min(n, target_rows // (h + 2)))
    while n % b:
        b -= 1
    return b


def group9_pallas(x_nhwc, banded):
    """Fused Group_9 forward on NHWC input; returns NHWC output."""
    N, H, W, C_in = x_nhwc.shape
    a1, s1, a2, s2 = banded["a1"], banded["s1"], banded["a2"], banded["s2"]
    WC_in, WC_out = a1.shape[1], a1.shape[2]
    assert WC_in == W * C_in
    C_out = WC_out // W

    # Batch B images per grid step (M ~= B*(H+2) rows per matmul).  Note: for
    # very small N this can leave grid=1; on v7x a grid >= 2 would let both
    # TensorCores work, but raising M is the bigger lever per the review.
    B = _pick_block_batch(N, H)

    x_flat = x_nhwc.reshape(N, H, W * C_in).astype(jnp.bfloat16)

    out_flat = pl.pallas_call(
        _group9_kernel,
        out_shape=jax.ShapeDtypeStruct((N, H, WC_out), jnp.float32),
        grid_spec=pltpu.PrefetchScalarGridSpec(
            num_scalar_prefetch=0,
            grid=(N // B,),
            in_specs=[
                pl.BlockSpec((B, H, WC_in), lambda n: (n, 0, 0)),
                pl.BlockSpec((3, WC_in, WC_out), lambda n: (0, 0, 0)),
                pl.BlockSpec((1, WC_out), lambda n: (0, 0)),
                pl.BlockSpec((3, WC_out, WC_out), lambda n: (0, 0, 0)),
                pl.BlockSpec((1, WC_out), lambda n: (0, 0)),
            ],
            out_specs=pl.BlockSpec((B, H, WC_out), lambda n: (n, 0, 0)),
            scratch_shapes=[
                pltpu.VMEM((B * (H + 2), WC_in), jnp.bfloat16),   # padded in
                pltpu.VMEM((B * (H + 2), WC_out), jnp.bfloat16),  # padded act
            ],
        ),
        compiler_params=pltpu.CompilerParams(
            dimension_semantics=("parallel",)),   # image-batches across TCs on v7x
    )(x_flat, a1, s1, a2, s2)

    return out_flat.reshape(N, H, W, C_out)


@jax.jit
def group9_forward(x_nchw, banded):
    # NCHW -> NHWC for the kernel, back to NCHW to match PyTorch convention.
    # (If the surrounding model is NHWC, these two transposes can be dropped.)
    x = jnp.transpose(x_nchw, (0, 2, 3, 1))
    y = group9_pallas(x, banded)
    return jnp.transpose(y, (0, 3, 1, 2))


def init_group9_params(key, ch_in, ch_out):
    def block_params(k, cin, cout):
        kw_, kb, kg, kbe, km, kv = jax.random.split(k, 6)
        return dict(
            w=jax.random.normal(kw_, (3, 3, cin, cout), jnp.float32) * 0.1,  # HWIO
            b=jax.random.normal(kb, (cout,), jnp.float32) * 0.1,
            gamma=1.0 + 0.1 * jax.random.normal(kg, (cout,), jnp.float32),
            beta=0.1 * jax.random.normal(kbe, (cout,), jnp.float32),
            mean=0.05 * jax.random.normal(km, (cout,), jnp.float32),
            var=0.5 + jnp.abs(jax.random.normal(kv, (cout,), jnp.float32)),
        )
    k1, k2 = jax.random.split(key)
    return dict(block1=block_params(k1, ch_in, ch_out),
                block2=block_params(k2, ch_out, ch_out))


def _reference_forward(x_nchw, params):
    """Pure-JAX reference (lax.conv, f32) for correctness check."""
    x = jnp.transpose(x_nchw, (0, 2, 3, 1))
    for name in ("block1", "block2"):
        p = params[name]
        y = lax.conv_general_dilated(
            x, p["w"], window_strides=(1, 1), padding="SAME",
            dimension_numbers=("NHWC", "HWIO", "NHWC")) + p["b"]
        scale = p["gamma"] / jnp.sqrt(p["var"] + BN_EPS)
        shift = p["beta"] - p["mean"] * scale
        y = y * scale + shift
        x = jnp.where(y >= 0, y, NEG_SLOPE * y)
    return jnp.transpose(x, (0, 3, 1, 2))


if __name__ == "__main__":
    key = jax.random.PRNGKey(0)
    k_x, k_p = jax.random.split(key)

    N, CH_IN, CH_OUT, H, W = 2, 4, 8, 16, 16
    x = jax.random.normal(k_x, (N, CH_IN, H, W), jnp.float32)   # NCHW input
    params = init_group9_params(k_p, CH_IN, CH_OUT)

    banded = prepare_group9(params, W)      # once per weight update, not per call

    out = jax.block_until_ready(group9_forward(x, banded))
    ref = _reference_forward(x, params)

    assert out.shape == (N, CH_OUT, H, W)
    # bf16 matmul inputs (f32 accumulation) -> looser tolerance vs f32 reference.
    assert jnp.allclose(out, ref, rtol=5e-2, atol=5e-2), "mismatch vs reference"

    print("KERNEL_OK")
</pallas_src>

<mosaic_0001>
module attributes {stable_mosaic.version = 11 : i64} {
  func.func @_group9_kernel(%arg0: i32, %arg1: memref<2x16x64xbf16, #tpu.memory_space<vmem>>, %arg2: memref<3x64x128xbf16, #tpu.memory_space<vmem>>, %arg3: memref<1x128xf32, #tpu.memory_space<vmem>>, %arg4: memref<3x128x128xbf16, #tpu.memory_space<vmem>>, %arg5: memref<1x128xf32, #tpu.memory_space<vmem>>, %arg6: memref<2x16x128xf32, #tpu.memory_space<vmem>>, %arg7: memref<36x64xbf16, #tpu.memory_space<vmem>>, %arg8: memref<36x128xbf16, #tpu.memory_space<vmem>>) attributes {dimension_semantics = [#tpu.dimension_semantics<parallel>], iteration_bounds = array<i64: 1>, scalar_prefetch = 0 : i64, scratch_operands = 2 : i64, tpu.core_type = #tpu.core_type<tc>, window_params = [{transform_indices = @transform_0, window_bounds = array<i64: 2, 16, 64>}, {pipeline_mode = #tpu.pipeline_mode<synchronous>, transform_indices = @transform_1, window_bounds = array<i64: 3, 64, 128>}, {pipeline_mode = #tpu.pipeline_mode<synchronous>, transform_indices = @transform_2, window_bounds = array<i64: 1, 128>}, {pipeline_mode = #tpu.pipeline_mode<synchronous>, transform_indices = @transform_3, window_bounds = array<i64: 3, 128, 128>}, {pipeline_mode = #tpu.pipeline_mode<synchronous>, transform_indices = @transform_4, window_bounds = array<i64: 1, 128>}, {transform_indices = @transform_5, window_bounds = array<i64: 2, 16, 128>}]} {
    %cst = arith.constant 0.000000e+00 : bf16
    %0 = vector.broadcast %cst : bf16 to vector<1x64xbf16>
    %cst_0 = arith.constant 0.000000e+00 : bf16
    %1 = vector.broadcast %cst_0 : bf16 to vector<1x128xbf16>
    %c0 = arith.constant 0 : index
    %c0_1 = arith.constant 0 : index
    %2 = vector.load %arg7[%c0, %c0_1] : memref<36x64xbf16, #tpu.memory_space<vmem>>, vector<1x64xbf16>
    tpu.vector_store %arg7[%c0, %c0_1], %0 {strides = array<i32>} : memref<36x64xbf16, #tpu.memory_space<vmem>>, vector<1x64xbf16>,
    %c17 = arith.constant 17 : index
    %c0_2 = arith.constant 0 : index
    %3 = vector.load %arg7[%c17, %c0_2] : memref<36x64xbf16, #tpu.memory_space<vmem>>, vector<1x64xbf16>
    tpu.vector_store %arg7[%c17, %c0_2], %0 {strides = array<i32>} : memref<36x64xbf16, #tpu.memory_space<vmem>>, vector<1x64xbf16>,
    %c0_3 = arith.constant 0 : index
    %c0_4 = arith.constant 0 : index
    %4 = vector.load %arg8[%c0_3, %c0_4] : memref<36x128xbf16, #tpu.memory_space<vmem>>, vector<1x128xbf16>
    tpu.vector_store %arg8[%c0_3, %c0_4], %1 {strides = array<i32>} : memref<36x128xbf16, #tpu.memory_space<vmem>>, vector<1x128xbf16>,
    %c17_5 = arith.constant 17 : index
    %c0_6 = arith.constant 0 : index
    %5 = vector.load %arg8[%c17_5, %c0_6] : memref<36x128xbf16, #tpu.memory_space<vmem>>, vector<1x128xbf16>
    tpu.vector_store %arg8[%c17_5, %c0_6], %1 {strides = array<i32>} : memref<36x128xbf16, #tpu.memory_space<vmem>>, vector<1x128xbf16>,
    %c18 = arith.constant 18 : index
    %c0_7 = arith.constant 0 : index
    %6 = vector.load %arg7[%c18, %c0_7] : memref<36x64xbf16, #tpu.memory_space<vmem>>, vector<1x64xbf16>
    tpu.vector_store %arg7[%c18, %c0_7], %0 {strides = array<i32>} : memref<36x64xbf16, #tpu.memory_space<vmem>>, vector<1x64xbf16>,
    %c35 = arith.constant 35 : index
    %c0_8 = arith.constant 0 : index
    %7 = vector.load %arg7[%c35, %c0_8] : memref<36x64xbf16, #tpu.memory_space<vmem>>, vector<1x64xbf16>
    tpu.vector_store %arg7[%c35, %c0_8], %0 {strides = array<i32>} : memref<36x64xbf16, #tpu.memory_space<vmem>>, vector<1x64xbf16>,
    %c18_9 = arith.constant 18 : index
    %c0_10 = arith.constant 0 : index
    %8 = vector.load %arg8[%c18_9, %c0_10] : memref<36x128xbf16, #tpu.memory_space<vmem>>, vector<1x128xbf16>
    tpu.vector_store %arg8[%c18_9, %c0_10], %1 {strides = array<i32>} : memref<36x128xbf16, #tpu.memory_space<vmem>>, vector<1x128xbf16>,
    %c35_11 = arith.constant 35 : index
    %c0_12 = arith.constant 0 : index
    %9 = vector.load %arg8[%c35_11, %c0_12] : memref<36x128xbf16, #tpu.memory_space<vmem>>, vector<1x128xbf16>
    tpu.vector_store %arg8[%c35_11, %c0_12], %1 {strides = array<i32>} : memref<36x128xbf16, #tpu.memory_space<vmem>>, vector<1x128xbf16>,
    %c0_13 = arith.constant 0 : index
    %c0_14 = arith.constant 0 : index
    %c0_15 = arith.constant 0 : index
    %10 = vector.load %arg1[%c0_13, %c0_14, %c0_15] : memref<2x16x64xbf16, #tpu.memory_space<vmem>>, vector<1x16x64xbf16>
    %11 = vector.shape_cast %10 : vector<1x16x64xbf16> to vector<16x64xbf16>
    %c1 = arith.constant 1 : index
    %c0_16 = arith.constant 0 : index
    %12 = vector.load %arg7[%c1, %c0_16] : memref<36x64xbf16, #tpu.memory_space<vmem>>, vector<16x64xbf16>
    tpu.vector_store %arg7[%c1, %c0_16], %11 {strides = array<i32>} : memref<36x64xbf16, #tpu.memory_space<vmem>>, vector<16x64xbf16>,
    %c1_17 = arith.constant 1 : index
    %c0_18 = arith.constant 0 : index
    %c0_19 = arith.constant 0 : index
    %13 = vector.load %arg1[%c1_17, %c0_18, %c0_19] : memref<2x16x64xbf16, #tpu.memory_space<vmem>>, vector<1x16x64xbf16>
    %14 = vector.shape_cast %13 : vector<1x16x64xbf16> to vector<16x64xbf16>
    %c19 = arith.constant 19 : index
    %c0_20 = arith.constant 0 : index
    %15 = vector.load %arg7[%c19, %c0_20] : memref<36x64xbf16, #tpu.memory_space<vmem>>, vector<16x64xbf16>
    tpu.vector_store %arg7[%c19, %c0_20], %14 {strides = array<i32>} : memref<36x64xbf16, #tpu.memory_space<vmem>>, vector<16x64xbf16>,
    %c0_21 = arith.constant 0 : index
    %c0_22 = arith.constant 0 : index
    %16 = vector.load %arg7[%c0_21, %c0_22] : memref<36x64xbf16, #tpu.memory_space<vmem>>, vector<34x64xbf16>
    %c0_23 = arith.constant 0 : index
    %c0_24 = arith.constant 0 : index
    %c0_25 = arith.constant 0 : index
    %17 = vector.load %arg2[%c0_23, %c0_24, %c0_25] : memref<3x64x128xbf16, #tpu.memory_space<vmem>>, vector<1x64x128xbf16>
    %18 = vector.shape_cast %17 : vector<1x64x128xbf16> to vector<64x128xbf16>
    %cst_26 = arith.constant dense<0.000000e+00> : vector<34x128xf32>
    %19 = tpu.matmul %16, %18, %cst_26 {dimension_numbers = #tpu.dot_dimension_numbers<[1], [0], [0], [1], [0, 0, 1, 1], [], []>} : vector<34x64xbf16>, vector<64x128xbf16>, vector<34x128xf32> -> vector<34x128xf32>
    %c1_27 = arith.constant 1 : index
    %c0_28 = arith.constant 0 : index
    %20 = vector.load %arg7[%c1_27, %c0_28] : memref<36x64xbf16, #tpu.memory_space<vmem>>, vector<34x64xbf16>
    %c1_29 = arith.constant 1 : index
    %c0_30 = arith.constant 0 : index
    %c0_31 = arith.constant 0 : index
    %21 = vector.load %arg2[%c1_29, %c0_30, %c0_31] : memref<3x64x128xbf16, #tpu.memory_space<vmem>>, vector<1x64x128xbf16>
    %22 = vector.shape_cast %21 : vector<1x64x128xbf16> to vector<64x128xbf16>
    %cst_32 = arith.constant dense<0.000000e+00> : vector<34x128xf32>
    %23 = tpu.matmul %20, %22, %cst_32 {dimension_numbers = #tpu.dot_dimension_numbers<[1], [0], [0], [1], [0, 0, 1, 1], [], []>} : vector<34x64xbf16>, vector<64x128xbf16>, vector<34x128xf32> -> vector<34x128xf32>
    %24 = arith.addf %19, %23 : vector<34x128xf32>
    %c2 = arith.constant 2 : index
    %c0_33 = arith.constant 0 : index
    %25 = vector.load %arg7[%c2, %c0_33] : memref<36x64xbf16, #tpu.memory_space<vmem>>, vector<34x64xbf16>
    %c2_34 = arith.constant 2 : index
    %c0_35 = arith.constant 0 : index
    %c0_36 = arith.constant 0 : index
    %26 = vector.load %arg2[%c2_34, %c0_35, %c0_36] : memref<3x64x128xbf16, #tpu.memory_space<vmem>>, vector<1x64x128xbf16>
    %27 = vector.shape_cast %26 : vector<1x64x128xbf16> to vector<64x128xbf16>
    %cst_37 = arith.constant dense<0.000000e+00> : vector<34x128xf32>
    %28 = tpu.matmul %25, %27, %cst_37 {dimension_numbers = #tpu.dot_dimension_numbers<[1], [0], [0], [1], [0, 0, 1, 1], [], []>} : vector<34x64xbf16>, vector<64x128xbf16>, vector<34x128xf32> -> vector<34x128xf32>
    %29 = arith.addf %24, %28 : vector<34x128xf32>
    %c0_38 = arith.constant 0 : index
    %c0_39 = arith.constant 0 : index
    %30 = vector.load %arg3[%c0_38, %c0_39] : memref<1x128xf32, #tpu.memory_space<vmem>>, vector<1x128xf32>
    %31 = vector.broadcast %30 : vector<1x128xf32> to vector<34x128xf32>
    %32 = arith.addf %29, %31 : vector<34x128xf32>
    %cst_40 = arith.constant 0.000000e+00 : f32
    %33 = vector.broadcast %cst_40 : f32 to vector<34x128xf32>
    %34 = arith.cmpf oge, %32, %33 : vector<34x128xf32>
    %cst_41 = arith.constant 0.00999999977 : f32
    %35 = vector.broadcast %cst_41 : f32 to vector<34x128xf32>
    %36 = arith.mulf %35, %32 : vector<34x128xf32>
    %37 = arith.select %34, %32, %36 : vector<34x128xi1>, vector<34x128xf32>
    %38 = arith.truncf %37 : vector<34x128xf32> to vector<34x128xbf16>
    %39 = vector.extract_strided_slice %38 {offsets = [0, 0], sizes = [16, 128], strides = [1, 1]} : vector<34x128xbf16> to vector<16x128xbf16>
    %c1_42 = arith.constant 1 : index
    %c0_43 = arith.constant 0 : index
    %40 = vector.load %arg8[%c1_42, %c0_43] : memref<36x128xbf16, #tpu.memory_space<vmem>>, vector<16x128xbf16>
    tpu.vector_store %arg8[%c1_42, %c0_43], %39 {strides = array<i32>} : memref<36x128xbf16, #tpu.memory_space<vmem>>, vector<16x128xbf16>,
    %41 = vector.extract_strided_slice %38 {offsets = [18, 0], sizes = [16, 128], strides = [1, 1]} : vector<34x128xbf16> to vector<16x128xbf16>
    %c19_44 = arith.constant 19 : index
    %c0_45 = arith.constant 0 : index
    %42 = vector.load %arg8[%c19_44, %c0_45] : memref<36x128xbf16, #tpu.memory_space<vmem>>, vector<16x128xbf16>
    tpu.vector_store %arg8[%c19_44, %c0_45], %41 {strides = array<i32>} : memref<36x128xbf16, #tpu.memory_space<vmem>>, vector<16x128xbf16>,
    %c0_46 = arith.constant 0 : index
    %c0_47 = arith.constant 0 : index
    %43 = vector.load %arg8[%c0_46, %c0_47] : memref<36x128xbf16, #tpu.memory_space<vmem>>, vector<34x128xbf16>
    %c0_48 = arith.constant 0 : index
    %c0_49 = arith.constant 0 : index
    %c0_50 = arith.constant 0 : index
    %44 = vector.load %arg4[%c0_48, %c0_49, %c0_50] : memref<3x128x128xbf16, #tpu.memory_space<vmem>>, vector<1x128x128xbf16>
    %45 = vector.shape_cast %44 : vector<1x128x128xbf16> to vector<128x128xbf16>
    %cst_51 = arith.constant dense<0.000000e+00> : vector<34x128xf32>
    %46 = tpu.matmul %43, %45, %cst_51 {dimension_numbers = #tpu.dot_dimension_numbers<[1], [0], [0], [1], [0, 0, 1, 1], [], []>} : vector<34x128xbf16>, vector<128x128xbf16>, vector<34x128xf32> -> vector<34x128xf32>
    %c1_52 = arith.constant 1 : index
    %c0_53 = arith.constant 0 : index
    %47 = vector.load %arg8[%c1_52, %c0_53] : memref<36x128xbf16, #tpu.memory_space<vmem>>, vector<34x128xbf16>
    %c1_54 = arith.constant 1 : index
    %c0_55 = arith.constant 0 : index
    %c0_56 = arith.constant 0 : index
    %48 = vector.load %arg4[%c1_54, %c0_55, %c0_56] : memref<3x128x128xbf16, #tpu.memory_space<vmem>>, vector<1x128x128xbf16>
    %49 = vector.shape_cast %48 : vector<1x128x128xbf16> to vector<128x128xbf16>
    %cst_57 = arith.constant dense<0.000000e+00> : vector<34x128xf32>
    %50 = tpu.matmul %47, %49, %cst_57 {dimension_numbers = #tpu.dot_dimension_numbers<[1], [0], [0], [1], [0, 0, 1, 1], [], []>} : vector<34x128xbf16>, vector<128x128xbf16>, vector<34x128xf32> -> vector<34x128xf32>
    %51 = arith.addf %46, %50 : vector<34x128xf32>
    %c2_58 = arith.constant 2 : index
    %c0_59 = arith.constant 0 : index
    %52 = vector.load %arg8[%c2_58, %c0_59] : memref<36x128xbf16, #tpu.memory_space<vmem>>, vector<34x128xbf16>
    %c2_60 = arith.constant 2 : index
    %c0_61 = arith.constant 0 : index
    %c0_62 = arith.constant 0 : index
    %53 = vector.load %arg4[%c2_60, %c0_61, %c0_62] : memref<3x128x128xbf16, #tpu.memory_space<vmem>>, vector<1x128x128xbf16>
    %54 = vector.shape_cast %53 : vector<1x128x128xbf16> to vector<128x128xbf16>
    %cst_63 = arith.constant dense<0.000000e+00> : vector<34x128xf32>
    %55 = tpu.matmul %52, %54, %cst_63 {dimension_numbers = #tpu.dot_dimension_numbers<[1], [0], [0], [1], [0, 0, 1, 1], [], []>} : vector<34x128xbf16>, vector<128x128xbf16>, vector<34x128xf32> -> vector<34x128xf32>
    %56 = arith.addf %51, %55 : vector<34x128xf32>
    %c0_64 = arith.constant 0 : index
    %c0_65 = arith.constant 0 : index
    %57 = vector.load %arg5[%c0_64, %c0_65] : memref<1x128xf32, #tpu.memory_space<vmem>>, vector<1x128xf32>
    %58 = vector.broadcast %57 : vector<1x128xf32> to vector<34x128xf32>
    %59 = arith.addf %56, %58 : vector<34x128xf32>
    %cst_66 = arith.constant 0.000000e+00 : f32
    %60 = vector.broadcast %cst_66 : f32 to vector<34x128xf32>
    %61 = arith.cmpf oge, %59, %60 : vector<34x128xf32>
    %cst_67 = arith.constant 0.00999999977 : f32
    %62 = vector.broadcast %cst_67 : f32 to vector<34x128xf32>
    %63 = arith.mulf %62, %59 : vector<34x128xf32>
    %64 = arith.select %61, %59, %63 : vector<34x128xi1>, vector<34x128xf32>
    %65 = vector.extract_strided_slice %64 {offsets = [0, 0], sizes = [16, 128], strides = [1, 1]} : vector<34x128xf32> to vector<16x128xf32>
    %c0_68 = arith.constant 0 : index
    %c0_69 = arith.constant 0 : index
    %c0_70 = arith.constant 0 : index
    %66 = vector.load %arg6[%c0_68, %c0_69, %c0_70] : memref<2x16x128xf32, #tpu.memory_space<vmem>>, vector<1x16x128xf32>
    %67 = vector.shape_cast %66 : vector<1x16x128xf32> to vector<16x128xf32>
    %68 = vector.shape_cast %65 : vector<16x128xf32> to vector<1x16x128xf32>
    tpu.vector_store %arg6[%c0_68, %c0_69, %c0_70], %68 {strides = array<i32>} : memref<2x16x128xf32, #tpu.memory_space<vmem>>, vector<1x16x128xf32>,
    %69 = vector.extract_strided_slice %64 {offsets = [18, 0], sizes = [16, 128], strides = [1, 1]} : vector<34x128xf32> to vector<16x128xf32>
    %c1_71 = arith.constant 1 : index
    %c0_72 = arith.constant 0 : index
    %c0_73 = arith.constant 0 : index
    %70 = vector.load %arg6[%c1_71, %c0_72, %c0_73] : memref<2x16x128xf32, #tpu.memory_space<vmem>>, vector<1x16x128xf32>
    %71 = vector.shape_cast %70 : vector<1x16x128xf32> to vector<16x128xf32>
    %72 = vector.shape_cast %69 : vector<16x128xf32> to vector<1x16x128xf32>
    tpu.vector_store %arg6[%c1_71, %c0_72, %c0_73], %72 {strides = array<i32>} : memref<2x16x128xf32, #tpu.memory_space<vmem>>, vector<1x16x128xf32>,
    return
  }
  func.func @transform_0(%arg0: i32) -> (i32, i32, i32) {
    %c0_i32 = arith.constant 0 : i32
    %c0_i32_0 = arith.constant 0 : i32
    %c0_i32_1 = arith.constant 0 : i32
    return %arg0, %c0_i32, %c0_i32_0 : i32, i32, i32
  }
  func.func @transform_1(%arg0: i32) -> (i32, i32, i32) {
    %c0_i32 = arith.constant 0 : i32
    %c0_i32_0 = arith.constant 0 : i32
    %c0_i32_1 = arith.constant 0 : i32
    %c0_i32_2 = arith.constant 0 : i32
    return %c0_i32, %c0_i32_0, %c0_i32_1 : i32, i32, i32
  }
  func.func @transform_2(%arg0: i32) -> (i32, i32) {
    %c0_i32 = arith.constant 0 : i32
    %c0_i32_0 = arith.constant 0 : i32
    %c0_i32_1 = arith.constant 0 : i32
    return %c0_i32, %c0_i32_0 : i32, i32
  }
  func.func @transform_3(%arg0: i32) -> (i32, i32, i32) {
    %c0_i32 = arith.constant 0 : i32
    %c0_i32_0 = arith.constant 0 : i32
    %c0_i32_1 = arith.constant 0 : i32
    %c0_i32_2 = arith.constant 0 : i32
    return %c0_i32, %c0_i32_0, %c0_i32_1 : i32, i32, i32
  }
  func.func @transform_4(%arg0: i32) -> (i32, i32) {
    %c0_i32 = arith.constant 0 : i32
    %c0_i32_0 = arith.constant 0 : i32
    %c0_i32_1 = arith.constant 0 : i32
    return %c0_i32, %c0_i32_0 : i32, i32
  }
  func.func @transform_5(%arg0: i32) -> (i32, i32, i32) {
    %c0_i32 = arith.constant 0 : i32
    %c0_i32_0 = arith.constant 0 : i32
    %c0_i32_1 = arith.constant 0 : i32
    return %arg0, %c0_i32, %c0_i32_0 : i32, i32, i32
  }
}

</mosaic_0001>

<llo_original>
// kernel: group9_forward.1
$region0: #{group9_forward.1}
  #allocation0 [shape = 'u32[]', space=smem, size = 0x4, offset = 0x4, fixed_abs, tag = 'smem constant byte address 0x4 - core index']
  #allocation1 [shape = 'u32[144,128]{1,0:T(1,128)}', space=vmem, size = 0x12000, scoped, tag = 'internal scratch']
  #allocation2 [shape = 'bf16[36,64]{1,0:T(8,128)(2,1)}', space=vmem, size = 0x2800, scoped, tag = 'scratch operand']
  #allocation3 [shape = 'bf16[36,128]{1,0:T(8,128)(2,1)}', space=vmem, size = 0x2800, scoped, tag = 'scratch operand']
  %s0 = inlined_call_operand.vmem [shape: bf16[2,16,64], index: 0, kind: input, shape index: {}]
  %s1 = inlined_call_operand.vmem [shape: bf16[3,64,128], index: 1, kind: input, shape index: {}]
  %s2 = inlined_call_operand.vmem [shape: f32[1,128], index: 2, kind: input, shape index: {}]
  %s3 = inlined_call_operand.vmem [shape: bf16[3,128,128], index: 3, kind: input, shape index: {}]
  %s4 = inlined_call_operand.vmem [shape: f32[1,128], index: 4, kind: input, shape index: {}]
  %s5 = inlined_call_operand.vmem [shape: f32[2,16,128], index: 5, kind: output, shape index: {}]
  %s6 = sld [smem:[#allocation0]]
  $region30: #{group9_forward.1} parent=0
    _
  %s8 = ssub.s32 1, %s6
  %s9 = scalar_select 0, %s8, %s6
  // Predicated region
  $region2: #{group9_forward.1} parent=0 // pred_check
    _
  $region3: #{group9_forward.1} parent=0 // pred_check_branch
    %11 = sbr.rel (0) target = $region5
  $region4: #{group9_forward.1} parent=0 // pred_region
    _
  $region5: #{group9_forward.1} parent=0 // pred_fallthru
    _
  // Predicated region
  $region6: #{group9_forward.1} parent=0 // pred_check
    _
  $region7: #{group9_forward.1} parent=0 // pred_check_branch
    %13 = sbr.rel (0) target = $region9
  $region8: #{group9_forward.1} parent=0 // pred_region
    _
  $region9: #{group9_forward.1} parent=0 // pred_fallthru
    _
  // Predicated region
  $region10: #{group9_forward.1} parent=0 // pred_check
    _
  $region11: #{group9_forward.1} parent=0 // pred_check_branch
    %15 = sbr.rel (0) target = $region13
  $region12: #{group9_forward.1} parent=0 // pred_region
    _
  $region13: #{group9_forward.1} parent=0 // pred_fallthru
    _
  // Predicated region
  $region14: #{group9_forward.1} parent=0 // pred_check
    _
  $region15: #{group9_forward.1} parent=0 // pred_check_branch
    %17 = sbr.rel (0) target = $region17
  $region16: #{group9_forward.1} parent=0 // pred_region
    _
  $region17: #{group9_forward.1} parent=0 // pred_fallthru
    _
  // Predicated region
  $region18: #{group9_forward.1} parent=0 // pred_check
    _
  $region19: #{group9_forward.1} parent=0 // pred_check_branch
    %19 = sbr.rel (0) target = $region21
  $region20: #{group9_forward.1} parent=0 // pred_region
    _
  $region21: #{group9_forward.1} parent=0 // pred_fallthru
    _
  %vm21 = vcmask 516096
  %vm22 = vsmask.f32 256
  %vm23 = vmand %vm21, %vm22
  %v24 = vld [vmem:[#allocation2] sm:$0x1]
  %v25 = vsel %vm23, 0, %v24
  %26 = vst [vmem:[#allocation2] sm:$0x1] %v25
  %vm27 = vsmask.f32 7938
  %vm28 = vmand %vm21, %vm27
  %v29 = vld [vmem:[#allocation2 + $0x8] sm:$0x1]
  %v30 = vsel %vm28, 0, %v29
  %31 = vst [vmem:[#allocation2 + $0x8] sm:$0x1] %v30
  %vm32 = vcmask 1040384
  %vm33 = vmand %vm32, %vm22
  %v34 = vld [vmem:[#allocation3] sm:$0x1]
  %v35 = vsel %vm33, 0, %v34
  %36 = vst [vmem:[#allocation3] sm:$0x1] %v35
  %vm37 = vmand %vm32, %vm27
  %v38 = vld [vmem:[#allocation3 + $0x8] sm:$0x1]
  %v39 = vsel %vm37, 0, %v38
  %40 = vst [vmem:[#allocation3 + $0x8] sm:$0x1] %v39
  %vm41 = vcmask 517121
  %vm42 = vsmask.f32 1280
  %vm43 = vmand %vm41, %vm42
  %v44 = vld [vmem:[#allocation2 + $0x8] sm:$0x2]
  %v45 = vsel %vm43, 0, %v44
  %46 = vst [vmem:[#allocation2 + $0x8] sm:$0x2] %v45
  %vm47 = vsmask.f32 7942
  %vm48 = vmand %vm41, %vm47
  %v49 = vld [vmem:[#allocation2 + $0x10] sm:$0x2]
  %v50 = vsel %vm48, 0, %v49
  %51 = vst [vmem:[#allocation2 + $0x10] sm:$0x2] %v50
  %vm52 = vcmask 1041409
  %vm53 = vmand %vm52, %vm42
  %v54 = vld [vmem:[#allocation3 + $0x8] sm:$0x2]
  %v55 = vsel %vm53, 0, %v54
  %56 = vst [vmem:[#allocation3 + $0x8] sm:$0x2] %v55
  %vm57 = vmand %vm52, %vm47
  %v58 = vld [vmem:[#allocation3 + $0x10] sm:$0x2]
  %v59 = vsel %vm57, 0, %v58
  %60 = vst [vmem:[#allocation3 + $0x10] sm:$0x2] %v59
  %v61 = vld [vmem:[%s0] sm:$0xf]
  %v62 = vld [vmem:[%s0 + $0x4] sm:$0xf]
  %vm63 = vsmask.f32 4368
  %vm64 = vmor %vm22, %vm63
  %v66 = vshrl.u32 %v61, 16
  %v68 = vrot.slane %v66, 7
  %v69 = vshll.u32 %v61, 16
  %v71 = vor.u32 %v68, %v69
  %v72 = vrot.slane %v68, 4
  %v74 = vshrl.u32 %v62, 16
  %v76 = vrot.slane %v74, 7
  %v77 = vshll.u32 %v62, 16
  %v79 = vor.u32 %v76, %v77
  %v80 = vsel %vm64, %v72, %v79
  %v81 = vrot.slane %v76, 4
  %vm85 = vcmask 519168
  %vm86 = vmand %vm85, %vm27
  %v87 = vld [vmem:[#allocation2] sm:$0xf]
  %v88 = vsel %vm86, %v71, %v87
  %89 = vst [vmem:[#allocation2] sm:$0xf] %v88
  %vm90 = vcmask 519168
  %91 = vst.msk [vmem:[#allocation2 + $0x4] sm:$0xf] %vm90, %v80
  %v92 = vld [vmem:[#allocation2 + $0x8] sm:$0x1]
  %v93 = vsel %vm23, %v81, %v92
  %94 = vst [vmem:[#allocation2 + $0x8] sm:$0x1] %v93
  %s95 = scalar_lea.vmem %s0, 8
  %v96 = vld [vmem:[%s95] sm:$0xf]
  %v97 = vld [vmem:[%s95 + $0x4] sm:$0xf]
  %vm98 = vsmask.f32 5392
  %vm99 = vmor %vm42, %vm98
  %v101 = vshrl.u32 %v96, 16
  %v103 = vrot.slane %v101, 6
  %v104 = vshll.u32 %v96, 16
  %v106 = vrot.slane %v104, 7
  %v107 = vor.u32 %v103, %v106
  %v108 = vrot.slane %v107, 4
  %v110 = vshrl.u32 %v97, 16
  %v112 = vrot.slane %v110, 6
  %v113 = vshll.u32 %v97, 16
  %v115 = vrot.slane %v113, 7
  %v116 = vor.u32 %v112, %v115
  %v117 = vsel %vm99, %v108, %v116
  %v118 = vrot.slane %v116, 4
  %vm122 = vcmask 519169
  %vm123 = vmand %vm122, %vm47
  %v124 = vld [vmem:[#allocation2 + $0x8] sm:$0xe]
  %v125 = vsel %vm123, %v107, %v124
  %126 = vst [vmem:[#allocation2 + $0x8] sm:$0xe] %v125
  %127 = vst.msk [vmem:[#allocation2 + $0xc] sm:$0xf] %vm90, %v117
  %vm128 = vcmask 517120
  %vm129 = vmand %vm128, %vm42
  %v130 = vld [vmem:[#allocation2 + $0x10] sm:$0x3]
  %v131 = vsel %vm129, %v118, %v130
  %132 = vst [vmem:[#allocation2 + $0x10] sm:$0x3] %v131
  %v133 = vld [vmem:[#allocation2] sm:$0xf]
  %v134 = vld [vmem:[#allocation2 + $0x4] sm:$0xf]
  %v135 = vld [vmem:[#allocation2 + $0x8] sm:$0xf]
  %v136 = vld [vmem:[#allocation2 + $0xc] sm:$0xf]
  %v137 = vld [vmem:[#allocation2 + $0x10] sm:$0x1]
  %v138 = vld [vmem:[%s1] sm:$0xf]
  %v139 = vld [vmem:[%s1 + $0x4] sm:$0xf]
  %v140 = vld [vmem:[%s1 + $0x8] sm:$0xf]
  %v141 = vld [vmem:[%s1 + $0xc] sm:$0xf]
  %v142 = vld [vmem:[%s1 + $0x10] sm:$0xf]
  %v143 = vld [vmem:[%s1 + $0x14] sm:$0xf]
  %v144 = vld [vmem:[%s1 + $0x18] sm:$0xf]
  %v145 = vld [vmem:[%s1 + $0x1c] sm:$0xf]
  %v146 = vld [vmem:[#allocation2 + $0x10] sm:$0x3]
  %s147 = scalar_lea.vmem %s1, 32
  %v148 = vld [vmem:[%s147] sm:$0xf]
  %v149 = vld [vmem:[%s147 + $0x4] sm:$0xf]
  %v150 = vld [vmem:[%s147 + $0x8] sm:$0xf]
  %v151 = vld [vmem:[%s147 + $0xc] sm:$0xf]
  %v152 = vld [vmem:[%s147 + $0x10] sm:$0xf]
  %v153 = vld [vmem:[%s147 + $0x14] sm:$0xf]
  %v154 = vld [vmem:[%s147 + $0x18] sm:$0xf]
  %v155 = vld [vmem:[%s147 + $0x1c] sm:$0xf]
  %v161 = vunpack.c.l.b16 %v133
  %v162 = vunpack.c.l.b16 %v134
  %v163 = vunpack.c.l.b16 %v135
  %v164 = vunpack.c.l.b16 %v136
  %v165 = vunpack.c.l.b16 %v146
  %v166 = vpack.c.b16 %v162, %v161
  %v167 = vpack.c.b16 %v164, %v163
  %v168 = vpack.c.b16 %v165, %v165
  %vm169 = vsmask.f32 7424
  %v171 = vshrl.u32 %v166, 16
  %v173 = vshll.u32 %v166, 16
  %v175 = vrot.slane %v173, 1
  %v176 = vor.u32 %v171, %v175
  %v178 = vshll.u32 %v167, 16
  %v180 = vrot.slane %v178, 1
  %v181 = vsel %vm169, %v176, %v180
  %v182 = vshrl.u32 %v167, 16
  %v184 = vor.u32 %v182, %v180
  %v186 = vshll.u32 %v168, 16
  %v188 = vrot.slane %v186, 1
  %v189 = vsel %vm169, %v184, %v188
  %v190 = vshrl.u32 %v168, 16
  %v192 = vor.u32 %v190, %v188
  %v201 = vunpack.c.l.b16 %v148
  %v202 = vunpack.c.l.b16 %v149
  %v203 = vunpack.c.l.b16 %v150
  %v204 = vunpack.c.l.b16 %v151
  %v205 = vunpack.c.l.b16 %v152
  %v206 = vunpack.c.l.b16 %v153
  %v207 = vunpack.c.l.b16 %v154
  %v208 = vunpack.c.l.b16 %v155
  %v209 = vpack.c.b16 %v202, %v201
  %v210 = vpack.c.b16 %v204, %v203
  %v211 = vpack.c.b16 %v206, %v205
  %v212 = vpack.c.b16 %v208, %v207
  %vm217 = vcmask 523264
  %v219 = vsel %vm217, %v181, 0
  %v222 = vsel %vm217, %v189, 0
  %v225 = vsel %vm217, %v192, 0
  %227 = vmatprep.subr.bf16.mxu0 0
  %228 = vmatpush1.bf16.msra.mxu0 0
  %229 = vmatprep.subr.bf16.mxu0 0
  %230 = vmatpush1.bf16.msra.mxu0 0
  %231 = vmatprep.subr.bf16.mxu0 0
  %232 = vmatpush1.bf16.msra.mxu0 0
  %233 = vmatprep.subr.bf16.mxu0 0
  %234 = vmatpush1.bf16.msra.mxu0 0
  %235 = vmatprep.subr.bf16.mxu0 0
  %236 = vmatpush1.bf16.msra.mxu0 %v212
  %237 = vmatprep.subr.bf16.mxu0 0
  %238 = vmatpush1.bf16.msra.mxu0 %v211
  %239 = vmatprep.subr.bf16.mxu0 0
  %240 = vmatpush1.bf16.msra.mxu0 %v210
  %241 = vmatprep.subr.bf16.mxu0 0
  %242 = vmatpush1.bf16.msra.mxu0 %v209
  %243 = vmatprep.subr.bf16.mxu0 0
  %244 = vmatpush2.bf16.msra.mxu0 0
  %245 = vmatprep.subr.bf16.mxu0 0
  %246 = vmatpush2.bf16.msra.mxu0 0
  %247 = vmatprep.subr.bf16.mxu0 0
  %248 = vmatpush2.bf16.msra.mxu0 0
  %249 = vmatprep.subr.bf16.mxu0 0
  %250 = vmatpush2.bf16.msra.mxu0 0
  %251 = vmatprep.subr.bf16.mxu0 0
  %252 = vmatpush2.bf16.msra.mxu0 0
  %253 = vmatprep.subr.bf16.mxu0 0
  %254 = vmatpush2.bf16.msra.mxu0 0
  %255 = vmatprep.subr.bf16.mxu0 0
  %256 = vmatpush2.bf16.msra.mxu0 0
  %257 = vmatprep.subr.bf16.mxu0 0
  %258 = vmatpush2.bf16.msra.mxu0 0
  %259 = vmatprep.mubr.bf16.mxu0 0
  %260 = vmatmul.mubr.bf16.gmra.mxu0 %v219
  %v261 = vpop.f32.mrf.mxu0
  %v262 = vadd.f32 0.0, %v261
  %v263 = vpop.f32.mrf.mxu0
  %v264 = vpop.f32.mrf.mxu0
  %v265 = vadd.f32 0.0, %v264
  %v266 = vpop.f32.mrf.mxu0
  %267 = vmatprep.mubr.bf16.mxu0 0
  %268 = vmatmul.mubr.bf16.gmra.mxu0 %v222
  %v269 = vpop.f32.mrf.mxu0
  %v270 = vadd.f32 0.0, %v269
  %v271 = vpop.f32.mrf.mxu0
  %v272 = vpop.f32.mrf.mxu0
  %v273 = vadd.f32 0.0, %v272
  %v274 = vpop.f32.mrf.mxu0
  %275 = vmatprep.mubr.bf16.mxu0 0
  %276 = vmatmul.mubr.bf16.gmra.mxu0 %v225
  %v277 = vpop.f32.mrf.mxu0
  %v278 = vadd.f32 0.0, %v277
  %v279 = vpop.f32.mrf.mxu0
  %v280 = vpop.f32.mrf.mxu0
  %v281 = vpop.f32.mrf.mxu0
  %282 = vdwg.mxu0
  %v284 = vunpack.c.l.b16 %v137
  %v285 = vpack.c.b16 %v284, %v284
  %v294 = vunpack.c.l.b16 %v138
  %v295 = vunpack.c.l.b16 %v139
  %v296 = vunpack.c.l.b16 %v140
  %v297 = vunpack.c.l.b16 %v141
  %v298 = vunpack.c.l.b16 %v142
  %v299 = vunpack.c.l.b16 %v143
  %v300 = vunpack.c.l.b16 %v144
  %v301 = vunpack.c.l.b16 %v145
  %v302 = vpack.c.b16 %v295, %v294
  %v303 = vpack.c.b16 %v297, %v296
  %v304 = vpack.c.b16 %v299, %v298
  %v305 = vpack.c.b16 %v301, %v300
  %v310 = vsel %vm217, %v166, 0
  %v312 = vsel %vm217, %v167, 0
  %v315 = vsel %vm217, %v285, 0
  %317 = vmatprep.subr.bf16.mxu0 0
  %318 = vmatpush1.bf16.msra.mxu0 0
  %319 = vmatprep.subr.bf16.mxu0 0
  %320 = vmatpush1.bf16.msra.mxu0 0
  %321 = vmatprep.subr.bf16.mxu0 0
  %322 = vmatpush1.bf16.msra.mxu0 0
  %323 = vmatprep.subr.bf16.mxu0 0
  %324 = vmatpush1.bf16.msra.mxu0 0
  %325 = vmatprep.subr.bf16.mxu0 0
  %326 = vmatpush1.bf16.msra.mxu0 %v305
  %327 = vmatprep.subr.bf16.mxu0 0
  %328 = vmatpush1.bf16.msra.mxu0 %v304
  %329 = vmatprep.subr.bf16.mxu0 0
  %330 = vmatpush1.bf16.msra.mxu0 %v303
  %331 = vmatprep.subr.bf16.mxu0 0
  %332 = vmatpush1.bf16.msra.mxu0 %v302
  %333 = vmatprep.subr.bf16.mxu0 0
  %334 = vmatpush2.bf16.msra.mxu0 0
  %335 = vmatprep.subr.bf16.mxu0 0
  %336 = vmatpush2.bf16.msra.mxu0 0
  %337 = vmatprep.subr.bf16.mxu0 0
  %338 = vmatpush2.bf16.msra.mxu0 0
  %339 = vmatprep.subr.bf16.mxu0 0
  %340 = vmatpush2.bf16.msra.mxu0 0
  %341 = vmatprep.subr.bf16.mxu0 0
  %342 = vmatpush2.bf16.msra.mxu0 0
  %343 = vmatprep.subr.bf16.mxu0 0
  %344 = vmatpush2.bf16.msra.mxu0 0
  %345 = vmatprep.subr.bf16.mxu0 0
  %346 = vmatpush2.bf16.msra.mxu0 0
  %347 = vmatprep.subr.bf16.mxu0 0
  %348 = vmatpush2.bf16.msra.mxu0 0
  %349 = vmatprep.mubr.bf16.mxu0 0
  %350 = vmatmul.mubr.bf16.gmra.mxu0 %v310
  %v351 = vpop.f32.mrf.mxu0
  %v352 = vadd.f32 %v262, %v351
  %v353 = vpop.f32.mrf.mxu0
  %v354 = vpop.f32.mrf.mxu0
  %v355 = vadd.f32 %v265, %v354
  %v356 = vpop.f32.mrf.mxu0
  %357 = vmatprep.mubr.bf16.mxu0 0
  %358 = vmatmul.mubr.bf16.gmra.mxu0 %v312
  %v359 = vpop.f32.mrf.mxu0
  %v360 = vadd.f32 %v270, %v359
  %v361 = vpop.f32.mrf.mxu0
  %v362 = vpop.f32.mrf.mxu0
  %v363 = vadd.f32 %v273, %v362
  %v364 = vpop.f32.mrf.mxu0
  %365 = vmatprep.mubr.bf16.mxu0 0
  %366 = vmatmul.mubr.bf16.gmra.mxu0 %v315
  %v367 = vpop.f32.mrf.mxu0
  %v368 = vadd.f32 %v278, %v367
  %v369 = vpop.f32.mrf.mxu0
  %v370 = vpop.f32.mrf.mxu0
  %v371 = vpop.f32.mrf.mxu0
  %372 = vdwg.mxu0
  %v373 = vld [vmem:[#allocation2] sm:$0xe]
  %s374 = scalar_lea.vmem %s1, 64
  %v375 = vld [vmem:[%s374] sm:$0xf]
  %v376 = vld [vmem:[%s374 + $0x4] sm:$0xf]
  %v377 = vld [vmem:[%s374 + $0x8] sm:$0xf]
  %v378 = vld [vmem:[%s374 + $0xc] sm:$0xf]
  %v379 = vld [vmem:[%s374 + $0x10] sm:$0xf]
  %v380 = vld [vmem:[%s374 + $0x14] sm:$0xf]
  %v381 = vld [vmem:[%s374 + $0x18] sm:$0xf]
  %v382 = vld [vmem:[%s374 + $0x1c] sm:$0xf]
  %v384 = vunpack.c.l.b16 %v373
  %v385 = vpack.c.b16 %v162, %v384
  %vm386 = vcmask 1046528
  %v387 = vrot.slane %v385, 1
  %v388 = vrot.slane %v167, 1
  %v389 = vsel %vm386, %v387, %v388
  %v390 = vrot.slane %v168, 1
  %v391 = vsel %vm386, %v388, %v390
  %v400 = vunpack.c.l.b16 %v375
  %v401 = vunpack.c.l.b16 %v376
  %v402 = vunpack.c.l.b16 %v377
  %v403 = vunpack.c.l.b16 %v378
  %v404 = vunpack.c.l.b16 %v379
  %v405 = vunpack.c.l.b16 %v380
  %v406 = vunpack.c.l.b16 %v381
  %v407 = vunpack.c.l.b16 %v382
  %v408 = vpack.c.b16 %v401, %v400
  %v409 = vpack.c.b16 %v403, %v402
  %v410 = vpack.c.b16 %v405, %v404
  %v411 = vpack.c.b16 %v407, %v406
  %v417 = vsel %vm217, %v389, 0
  %v420 = vsel %vm217, %v391, 0
  %v423 = vsel %vm217, %v390, 0
  %425 = vmatprep.subr.bf16.mxu0 0
  %426 = vmatpush1.bf16.msra.mxu0 0
  %427 = vmatprep.subr.bf16.mxu0 0
  %428 = vmatpush1.bf16.msra.mxu0 0
  %429 = vmatprep.subr.bf16.mxu0 0
  %430 = vmatpush1.bf16.msra.mxu0 0
  %431 = vmatprep.subr.bf16.mxu0 0
  %432 = vmatpush1.bf16.msra.mxu0 0
  %433 = vmatprep.subr.bf16.mxu0 0
  %434 = vmatpush1.bf16.msra.mxu0 %v411
  %435 = vmatprep.subr.bf16.mxu0 0
  %436 = vmatpush1.bf16.msra.mxu0 %v410
  %437 = vmatprep.subr.bf16.mxu0 0
  %438 = vmatpush1.bf16.msra.mxu0 %v409
  %439 = vmatprep.subr.bf16.mxu0 0
  %440 = vmatpush1.bf16.msra.mxu0 %v408
  %441 = vmatprep.subr.bf16.mxu0 0
  %442 = vmatpush2.bf16.msra.mxu0 0
  %443 = vmatprep.subr.bf16.mxu0 0
  %444 = vmatpush2.bf16.msra.mxu0 0
  %445 = vmatprep.subr.bf16.mxu0 0
  %446 = vmatpush2.bf16.msra.mxu0 0
  %447 = vmatprep.subr.bf16.mxu0 0
  %448 = vmatpush2.bf16.msra.mxu0 0
  %449 = vmatprep.subr.bf16.mxu0 0
  %450 = vmatpush2.bf16.msra.mxu0 0
  %451 = vmatprep.subr.bf16.mxu0 0
  %452 = vmatpush2.bf16.msra.mxu0 0
  %453 = vmatprep.subr.bf16.mxu0 0
  %454 = vmatpush2.bf16.msra.mxu0 0
  %455 = vmatprep.subr.bf16.mxu0 0
  %456 = vmatpush2.bf16.msra.mxu0 0
  %457 = vmatprep.mubr.bf16.mxu0 0
  %458 = vmatmul.mubr.bf16.gmra.mxu0 %v417
  %v459 = vpop.f32.mrf.mxu0
  %v460 = vadd.f32 0.0, %v459
  %v461 = vpop.f32.mrf.mxu0
  %v462 = vpop.f32.mrf.mxu0
  %v463 = vadd.f32 0.0, %v462
  %v464 = vpop.f32.mrf.mxu0
  %465 = vmatprep.mubr.bf16.mxu0 0
  %466 = vmatmul.mubr.bf16.gmra.mxu0 %v420
  %v467 = vpop.f32.mrf.mxu0
  %v468 = vadd.f32 0.0, %v467
  %v469 = vpop.f32.mrf.mxu0
  %v470 = vpop.f32.mrf.mxu0
  %v471 = vadd.f32 0.0, %v470
  %v472 = vpop.f32.mrf.mxu0
  %473 = vmatprep.mubr.bf16.mxu0 0
  %474 = vmatmul.mubr.bf16.gmra.mxu0 %v423
  %v475 = vpop.f32.mrf.mxu0
  %v476 = vadd.f32 0.0, %v475
  %v477 = vpop.f32.mrf.mxu0
  %v478 = vpop.f32.mrf.mxu0
  %v479 = vpop.f32.mrf.mxu0
  %480 = vdwg.mxu0
  %v481 = vadd.f32 %v352, %v460
  %v482 = vadd.f32 %v355, %v463
  %v483 = vadd.f32 %v360, %v468
  %v484 = vadd.f32 %v363, %v471
  %v485 = vadd.f32 %v368, %v476
  %v486 = vld [vmem:[%s2] sm:$0x1]
  %v488 = vlaneseq
  %v489 = vshrl.u32 %v488, 7
  %v490 = vsub.s32 0, %v489
  %v491 = vrot.slane %v486, %v490
  %v493 = vadd.f32 %v481, %v491
  %v494 = vadd.f32 %v482, %v491
  %v495 = vadd.f32 %v483, %v491
  %v496 = vadd.f32 %v484, %v491
  %v497 = vadd.f32 %v485, %v491
  %vm498 = vcmp.ge.f32.partialorder %v493, 0.0
  %vm499 = vcmp.ge.f32.partialorder %v494, 0.0
  %vm500 = vcmp.ge.f32.partialorder %v495, 0.0
  %vm501 = vcmp.ge.f32.partialorder %v496, 0.0
  %vm502 = vcmp.ge.f32.partialorder %v497, 0.0
  %v503 = vmul.f32 %v493, 0.01
  %v504 = vmul.f32 %v494, 0.01
  %v505 = vmul.f32 %v495, 0.01
  %v506 = vmul.f32 %v496, 0.01
  %v507 = vmul.f32 %v497, 0.01
  %v508 = vsel %vm498, %v493, %v503
  %v509 = vsel %vm499, %v494, %v504
  %v510 = vsel %vm500, %v495, %v505
  %v511 = vsel %vm501, %v496, %v506
  %v512 = vsel %vm502, %v497, %v507
  %v513 = vpack.c.bf16 %v509, %v508
  %v514 = vpack.c.bf16 %v511, %v510
  %v515 = vpack.c.bf16 %v512, %v512
  %v517 = vunpack.c.l.b16 %v513
  %v518 = vunpack.c.h.b16 %v513
  %v519 = vpack.c.b16 %v517, %v517
  %v520 = vpack.c.b16 %v518, %v518
  %v522 = vshrl.u32 %v519, 16
  %v524 = vrot.slane %v522, 7
  %v525 = vshll.u32 %v519, 16
  %v527 = vor.u32 %v524, %v525
  %v528 = vrot.slane %v524, 4
  %v530 = vshrl.u32 %v520, 16
  %v532 = vrot.slane %v530, 7
  %v533 = vshll.u32 %v520, 16
  %v535 = vor.u32 %v532, %v533
  %v536 = vsel %vm64, %v528, %v535
  %v537 = vrot.slane %v532, 4
  %vm541 = vcmask 1043456
  %vm542 = vmand %vm541, %vm27
  %v543 = vld [vmem:[#allocation3] sm:$0xf]
  %v544 = vsel %vm542, %v527, %v543
  %545 = vst [vmem:[#allocation3] sm:$0xf] %v544
  %546 = vst [vmem:[#allocation3 + $0x4] sm:$0xf] %v536
  %v547 = vld [vmem:[#allocation3 + $0x8] sm:$0x1]
  %v548 = vsel %vm33, %v537, %v547
  %549 = vst [vmem:[#allocation3 + $0x8] sm:$0x1] %v548
  %v552 = vunpack.c.l.b16 %v514
  %v553 = vunpack.c.h.b16 %v514
  %v554 = vunpack.c.l.b16 %v515
  %v555 = vpack.c.b16 %v552, %v552
  %v556 = vpack.c.b16 %v553, %v553
  %v557 = vpack.c.b16 %v554, %v554
  %v559 = vshrl.u32 %v555, 16
  %v561 = vrot.slane %v559, 7
  %v562 = vshll.u32 %v555, 16
  %v564 = vor.u32 %v561, %v562
  %v565 = vrot.slane %v561, 4
  %v567 = vshrl.u32 %v556, 16
  %v569 = vrot.slane %v567, 7
  %v570 = vshll.u32 %v556, 16
  %v572 = vor.u32 %v569, %v570
  %v573 = vsel %vm64, %v565, %v572
  %v574 = vrot.slane %v569, 4
  %v576 = vshrl.u32 %v557, 16
  %v578 = vrot.slane %v576, 7
  %v579 = vshll.u32 %v557, 16
  %v581 = vor.u32 %v578, %v579
  %v582 = vsel %vm64, %v574, %v581
  %vm586 = vcmask 1043457
  %vm587 = vmand %vm586, %vm47
  %v588 = vld [vmem:[#allocation3 + $0x8] sm:$0xe]
  %v589 = vsel %vm587, %v564, %v588
  %590 = vst [vmem:[#allocation3 + $0x8] sm:$0xe] %v589
  %591 = vst [vmem:[#allocation3 + $0xc] sm:$0xf] %v573
  %vm592 = vcmask 1041408
  %vm593 = vmand %vm592, %vm42
  %v594 = vld [vmem:[#allocation3 + $0x10] sm:$0x3]
  %v595 = vsel %vm593, %v582, %v594
  %596 = vst [vmem:[#allocation3 + $0x10] sm:$0x3] %v595
  %v597 = vld [vmem:[#allocation3] sm:$0xf]
  %v598 = vld [vmem:[#allocation3 + $0x4] sm:$0xf]
  %v599 = vld [vmem:[#allocation3 + $0x8] sm:$0xf]
  %v600 = vld [vmem:[#allocation3 + $0xc] sm:$0xf]
  %v601 = vld [vmem:[#allocation3 + $0x10] sm:$0x1]
  %v602 = vld [vmem:[%s3] sm:$0xf]
  %v603 = vld [vmem:[%s3 + $0x4] sm:$0xf]
  %v604 = vld [vmem:[%s3 + $0x8] sm:$0xf]
  %v605 = vld [vmem:[%s3 + $0xc] sm:$0xf]
  %v606 = vld [vmem:[%s3 + $0x10] sm:$0xf]
  %v607 = vld [vmem:[%s3 + $0x14] sm:$0xf]
  %v608 = vld [vmem:[%s3 + $0x18] sm:$0xf]
  %v609 = vld [vmem:[%s3 + $0x1c] sm:$0xf]
  %v610 = vld [vmem:[%s3 + $0x20] sm:$0xf]
  %v611 = vld [vmem:[%s3 + $0x24] sm:$0xf]
  %v612 = vld [vmem:[%s3 + $0x28] sm:$0xf]
  %v613 = vld [vmem:[%s3 + $0x2c] sm:$0xf]
  %v614 = vld [vmem:[%s3 + $0x30] sm:$0xf]
  %v615 = vld [vmem:[%s3 + $0x34] sm:$0xf]
  %v616 = vld [vmem:[%s3 + $0x38] sm:$0xf]
  %v617 = vld [vmem:[%s3 + $0x3c] sm:$0xf]
  %v618 = vld [vmem:[#allocation3 + $0x10] sm:$0x3]
  %s619 = scalar_lea.vmem %s3, 64
  %v620 = vld [vmem:[%s619] sm:$0xf]
  %v621 = vld [vmem:[%s619 + $0x4] sm:$0xf]
  %v622 = vld [vmem:[%s619 + $0x8] sm:$0xf]
  %v623 = vld [vmem:[%s619 + $0xc] sm:$0xf]
  %v624 = vld [vmem:[%s619 + $0x10] sm:$0xf]
  %v625 = vld [vmem:[%s619 + $0x14] sm:$0xf]
  %v626 = vld [vmem:[%s619 + $0x18] sm:$0xf]
  %v627 = vld [vmem:[%s619 + $0x1c] sm:$0xf]
  %v628 = vld [vmem:[%s619 + $0x20] sm:$0xf]
  %v629 = vld [vmem:[%s619 + $0x24] sm:$0xf]
  %v630 = vld [vmem:[%s619 + $0x28] sm:$0xf]
  %v631 = vld [vmem:[%s619 + $0x2c] sm:$0xf]
  %v632 = vld [vmem:[%s619 + $0x30] sm:$0xf]
  %v633 = vld [vmem:[%s619 + $0x34] sm:$0xf]
  %v634 = vld [vmem:[%s619 + $0x38] sm:$0xf]
  %v635 = vld [vmem:[%s619 + $0x3c] sm:$0xf]
  %v641 = vunpack.c.l.b16 %v597
  %v642 = vunpack.c.l.b16 %v598
  %v643 = vunpack.c.l.b16 %v599
  %v644 = vunpack.c.l.b16 %v600
  %v645 = vunpack.c.l.b16 %v618
  %v646 = vpack.c.b16 %v642, %v641
  %v647 = vpack.c.b16 %v644, %v643
  %v648 = vpack.c.b16 %v645, %v645
  %v650 = vshrl.u32 %v646, 16
  %v652 = vshll.u32 %v646, 16
  %v654 = vrot.slane %v652, 1
  %v655 = vor.u32 %v650, %v654
  %v657 = vshll.u32 %v647, 16
  %v659 = vrot.slane %v657, 1
  %v660 = vsel %vm169, %v655, %v659
  %v661 = vshrl.u32 %v647, 16
  %v663 = vor.u32 %v661, %v659
  %v665 = vshll.u32 %v648, 16
  %v667 = vrot.slane %v665, 1
  %v668 = vsel %vm169, %v663, %v667
  %v669 = vshrl.u32 %v648, 16
  %v671 = vor.u32 %v669, %v667
  %v691 = vunpack.c.l.b16 %v620
  %v692 = vunpack.c.l.b16 %v621
  %v693 = vunpack.c.l.b16 %v622
  %v694 = vunpack.c.l.b16 %v623
  %v695 = vunpack.c.l.b16 %v624
  %v696 = vunpack.c.l.b16 %v625
  %v697 = vunpack.c.l.b16 %v626
  %v698 = vunpack.c.l.b16 %v627
  %v699 = vunpack.c.l.b16 %v628
  %v700 = vunpack.c.l.b16 %v629
  %v701 = vunpack.c.l.b16 %v630
  %v702 = vunpack.c.l.b16 %v631
  %v703 = vunpack.c.l.b16 %v632
  %v704 = vunpack.c.l.b16 %v633
  %v705 = vunpack.c.l.b16 %v634
  %v706 = vunpack.c.l.b16 %v635
  %v707 = vpack.c.b16 %v692, %v691
  %v708 = vpack.c.b16 %v694, %v693
  %v709 = vpack.c.b16 %v696, %v695
  %v710 = vpack.c.b16 %v698, %v697
  %v711 = vpack.c.b16 %v700, %v699
  %v712 = vpack.c.b16 %v702, %v701
  %v713 = vpack.c.b16 %v704, %v703
  %v714 = vpack.c.b16 %v706, %v705
  %723 = vmatprep.subr.bf16.mxu0 0
  %724 = vmatpush1.bf16.msra.mxu0 %v714
  %725 = vmatprep.subr.bf16.mxu0 0
  %726 = vmatpush1.bf16.msra.mxu0 %v713
  %727 = vmatprep.subr.bf16.mxu0 0
  %728 = vmatpush1.bf16.msra.mxu0 %v712
  %729 = vmatprep.subr.bf16.mxu0 0
  %730 = vmatpush1.bf16.msra.mxu0 %v711
  %731 = vmatprep.subr.bf16.mxu0 0
  %732 = vmatpush1.bf16.msra.mxu0 %v710
  %733 = vmatprep.subr.bf16.mxu0 0
  %734 = vmatpush1.bf16.msra.mxu0 %v709
  %735 = vmatprep.subr.bf16.mxu0 0
  %736 = vmatpush1.bf16.msra.mxu0 %v708
  %737 = vmatprep.subr.bf16.mxu0 0
  %738 = vmatpush1.bf16.msra.mxu0 %v707
  %739 = vmatprep.subr.bf16.mxu0 0
  %740 = vmatpush2.bf16.msra.mxu0 0
  %741 = vmatprep.subr.bf16.mxu0 0
  %742 = vmatpush2.bf16.msra.mxu0 0
  %743 = vmatprep.subr.bf16.mxu0 0
  %744 = vmatpush2.bf16.msra.mxu0 0
  %745 = vmatprep.subr.bf16.mxu0 0
  %746 = vmatpush2.bf16.msra.mxu0 0
  %747 = vmatprep.subr.bf16.mxu0 0
  %748 = vmatpush2.bf16.msra.mxu0 0
  %749 = vmatprep.subr.bf16.mxu0 0
  %750 = vmatpush2.bf16.msra.mxu0 0
  %751 = vmatprep.subr.bf16.mxu0 0
  %752 = vmatpush2.bf16.msra.mxu0 0
  %753 = vmatprep.subr.bf16.mxu0 0
  %754 = vmatpush2.bf16.msra.mxu0 0
  %755 = vmatprep.mubr.bf16.mxu0 0
  %756 = vmatmul.mubr.bf16.gmra.mxu0 %v660
  %v757 = vpop.f32.mrf.mxu0
  %v758 = vadd.f32 0.0, %v757
  %v759 = vpop.f32.mrf.mxu0
  %v760 = vpop.f32.mrf.mxu0
  %v761 = vadd.f32 0.0, %v760
  %v762 = vpop.f32.mrf.mxu0
  %763 = vmatprep.mubr.bf16.mxu0 0
  %764 = vmatmul.mubr.bf16.gmra.mxu0 %v668
  %v765 = vpop.f32.mrf.mxu0
  %v766 = vadd.f32 0.0, %v765
  %v767 = vpop.f32.mrf.mxu0
  %v768 = vpop.f32.mrf.mxu0
  %v769 = vadd.f32 0.0, %v768
  %v770 = vpop.f32.mrf.mxu0
  %771 = vmatprep.mubr.bf16.mxu0 0
  %772 = vmatmul.mubr.bf16.gmra.mxu0 %v671
  %v773 = vpop.f32.mrf.mxu0
  %v774 = vadd.f32 0.0, %v773
  %v775 = vpop.f32.mrf.mxu0
  %v776 = vpop.f32.mrf.mxu0
  %v777 = vpop.f32.mrf.mxu0
  %778 = vdwg.mxu0
  %v780 = vunpack.c.l.b16 %v601
  %v781 = vpack.c.b16 %v780, %v780
  %v801 = vunpack.c.l.b16 %v602
  %v802 = vunpack.c.l.b16 %v603
  %v803 = vunpack.c.l.b16 %v604
  %v804 = vunpack.c.l.b16 %v605
  %v805 = vunpack.c.l.b16 %v606
  %v806 = vunpack.c.l.b16 %v607
  %v807 = vunpack.c.l.b16 %v608
  %v808 = vunpack.c.l.b16 %v609
  %v809 = vunpack.c.l.b16 %v610
  %v810 = vunpack.c.l.b16 %v611
  %v811 = vunpack.c.l.b16 %v612
  %v812 = vunpack.c.l.b16 %v613
  %v813 = vunpack.c.l.b16 %v614
  %v814 = vunpack.c.l.b16 %v615
  %v815 = vunpack.c.l.b16 %v616
  %v816 = vunpack.c.l.b16 %v617
  %v817 = vpack.c.b16 %v802, %v801
  %v818 = vpack.c.b16 %v804, %v803
  %v819 = vpack.c.b16 %v806, %v805
  %v820 = vpack.c.b16 %v808, %v807
  %v821 = vpack.c.b16 %v810, %v809
  %v822 = vpack.c.b16 %v812, %v811
  %v823 = vpack.c.b16 %v814, %v813
  %v824 = vpack.c.b16 %v816, %v815
  %833 = vmatprep.subr.bf16.mxu0 0
  %834 = vmatpush1.bf16.msra.mxu0 %v824
  %835 = vmatprep.subr.bf16.mxu0 0
  %836 = vmatpush1.bf16.msra.mxu0 %v823
  %837 = vmatprep.subr.bf16.mxu0 0
  %838 = vmatpush1.bf16.msra.mxu0 %v822
  %839 = vmatprep.subr.bf16.mxu0 0
  %840 = vmatpush1.bf16.msra.mxu0 %v821
  %841 = vmatprep.subr.bf16.mxu0 0
  %842 = vmatpush1.bf16.msra.mxu0 %v820
  %843 = vmatprep.subr.bf16.mxu0 0
  %844 = vmatpush1.bf16.msra.mxu0 %v819
  %845 = vmatprep.subr.bf16.mxu0 0
  %846 = vmatpush1.bf16.msra.mxu0 %v818
  %847 = vmatprep.subr.bf16.mxu0 0
  %848 = vmatpush1.bf16.msra.mxu0 %v817
  %849 = vmatprep.subr.bf16.mxu0 0
  %850 = vmatpush2.bf16.msra.mxu0 0
  %851 = vmatprep.subr.bf16.mxu0 0
  %852 = vmatpush2.bf16.msra.mxu0 0
  %853 = vmatprep.subr.bf16.mxu0 0
  %854 = vmatpush2.bf16.msra.mxu0 0
  %855 = vmatprep.subr.bf16.mxu0 0
  %856 = vmatpush2.bf16.msra.mxu0 0
  %857 = vmatprep.subr.bf16.mxu0 0
  %858 = vmatpush2.bf16.msra.mxu0 0
  %859 = vmatprep.subr.bf16.mxu0 0
  %860 = vmatpush2.bf16.msra.mxu0 0
  %861 = vmatprep.subr.bf16.mxu0 0
  %862 = vmatpush2.bf16.msra.mxu0 0
  %863 = vmatprep.subr.bf16.mxu0 0
  %864 = vmatpush2.bf16.msra.mxu0 0
  %865 = vmatprep.mubr.bf16.mxu0 0
  %866 = vmatmul.mubr.bf16.gmra.mxu0 %v646
  %v867 = vpop.f32.mrf.mxu0
  %v868 = vadd.f32 %v758, %v867
  %v869 = vpop.f32.mrf.mxu0
  %v870 = vpop.f32.mrf.mxu0
  %v871 = vadd.f32 %v761, %v870
  %v872 = vpop.f32.mrf.mxu0
  %873 = vmatprep.mubr.bf16.mxu0 0
  %874 = vmatmul.mubr.bf16.gmra.mxu0 %v647
  %v875 = vpop.f32.mrf.mxu0
  %v876 = vadd.f32 %v766, %v875
  %v877 = vpop.f32.mrf.mxu0
  %v878 = vpop.f32.mrf.mxu0
  %v879 = vadd.f32 %v769, %v878
  %v880 = vpop.f32.mrf.mxu0
  %881 = vmatprep.mubr.bf16.mxu0 0
  %882 = vmatmul.mubr.bf16.gmra.mxu0 %v781
  %v883 = vpop.f32.mrf.mxu0
  %v884 = vadd.f32 %v774, %v883
  %v885 = vpop.f32.mrf.mxu0
  %v886 = vpop.f32.mrf.mxu0
  %v887 = vpop.f32.mrf.mxu0
  %888 = vdwg.mxu0
  %v889 = vld [vmem:[#allocation3] sm:$0xe]
  %s890 = scalar_lea.vmem %s3, 128
  %v891 = vld [vmem:[%s890] sm:$0xf]
  %v892 = vld [vmem:[%s890 + $0x4] sm:$0xf]
  %v893 = vld [vmem:[%s890 + $0x8] sm:$0xf]
  %v894 = vld [vmem:[%s890 + $0xc] sm:$0xf]
  %v895 = vld [vmem:[%s890 + $0x10] sm:$0xf]
  %v896 = vld [vmem:[%s890 + $0x14] sm:$0xf]
  %v897 = vld [vmem:[%s890 + $0x18] sm:$0xf]
  %v898 = vld [vmem:[%s890 + $0x1c] sm:$0xf]
  %v899 = vld [vmem:[%s890 + $0x20] sm:$0xf]
  %v900 = vld [vmem:[%s890 + $0x24] sm:$0xf]
  %v901 = vld [vmem:[%s890 + $0x28] sm:$0xf]
  %v902 = vld [vmem:[%s890 + $0x2c] sm:$0xf]
  %v903 = vld [vmem:[%s890 + $0x30] sm:$0xf]
  %v904 = vld [vmem:[%s890 + $0x34] sm:$0xf]
  %v905 = vld [vmem:[%s890 + $0x38] sm:$0xf]
  %v906 = vld [vmem:[%s890 + $0x3c] sm:$0xf]
  %v908 = vunpack.c.l.b16 %v889
  %v909 = vpack.c.b16 %v642, %v908
  %v910 = vrot.slane %v909, 1
  %v911 = vrot.slane %v647, 1
  %v912 = vsel %vm386, %v910, %v911
  %v913 = vrot.slane %v648, 1
  %v914 = vsel %vm386, %v911, %v913
  %v934 = vunpack.c.l.b16 %v891
  %v935 = vunpack.c.l.b16 %v892
  %v936 = vunpack.c.l.b16 %v893
  %v937 = vunpack.c.l.b16 %v894
  %v938 = vunpack.c.l.b16 %v895
  %v939 = vunpack.c.l.b16 %v896
  %v940 = vunpack.c.l.b16 %v897
  %v941 = vunpack.c.l.b16 %v898
  %v942 = vunpack.c.l.b16 %v899
  %v943 = vunpack.c.l.b16 %v900
  %v944 = vunpack.c.l.b16 %v901
  %v945 = vunpack.c.l.b16 %v902
  %v946 = vunpack.c.l.b16 %v903
  %v947 = vunpack.c.l.b16 %v904
  %v948 = vunpack.c.l.b16 %v905
  %v949 = vunpack.c.l.b16 %v906
  %v950 = vpack.c.b16 %v935, %v934
  %v951 = vpack.c.b16 %v937, %v936
  %v952 = vpack.c.b16 %v939, %v938
  %v953 = vpack.c.b16 %v941, %v940
  %v954 = vpack.c.b16 %v943, %v942
  %v955 = vpack.c.b16 %v945, %v944
  %v956 = vpack.c.b16 %v947, %v946
  %v957 = vpack.c.b16 %v949, %v948
  %966 = vmatprep.subr.bf16.mxu0 0
  %967 = vmatpush1.bf16.msra.mxu0 %v957
  %968 = vmatprep.subr.bf16.mxu0 0
  %969 = vmatpush1.bf16.msra.mxu0 %v956
  %970 = vmatprep.subr.bf16.mxu0 0
  %971 = vmatpush1.bf16.msra.mxu0 %v955
  %972 = vmatprep.subr.bf16.mxu0 0
  %973 = vmatpush1.bf16.msra.mxu0 %v954
  %974 = vmatprep.subr.bf16.mxu0 0
  %975 = vmatpush1.bf16.msra.mxu0 %v953
  %976 = vmatprep.subr.bf16.mxu0 0
  %977 = vmatpush1.bf16.msra.mxu0 %v952
  %978 = vmatprep.subr.bf16.mxu0 0
  %979 = vmatpush1.bf16.msra.mxu0 %v951
  %980 = vmatprep.subr.bf16.mxu0 0
  %981 = vmatpush1.bf16.msra.mxu0 %v950
  %982 = vmatprep.subr.bf16.mxu0 0
  %983 = vmatpush2.bf16.msra.mxu0 0
  %984 = vmatprep.subr.bf16.mxu0 0
  %985 = vmatpush2.bf16.msra.mxu0 0
  %986 = vmatprep.subr.bf16.mxu0 0
  %987 = vmatpush2.bf16.msra.mxu0 0
  %988 = vmatprep.subr.bf16.mxu0 0
  %989 = vmatpush2.bf16.msra.mxu0 0
  %990 = vmatprep.subr.bf16.mxu0 0
  %991 = vmatpush2.bf16.msra.mxu0 0
  %992 = vmatprep.subr.bf16.mxu0 0
  %993 = vmatpush2.bf16.msra.mxu0 0
  %994 = vmatprep.subr.bf16.mxu0 0
  %995 = vmatpush2.bf16.msra.mxu0 0
  %996 = vmatprep.subr.bf16.mxu0 0
  %997 = vmatpush2.bf16.msra.mxu0 0
  %998 = vmatprep.mubr.bf16.mxu0 0
  %999 = vmatmul.mubr.bf16.gmra.mxu0 %v912
  %v1000 = vpop.f32.mrf.mxu0
  %v1001 = vadd.f32 0.0, %v1000
  %v1002 = vpop.f32.mrf.mxu0
  %v1003 = vpop.f32.mrf.mxu0
  %v1004 = vadd.f32 0.0, %v1003
  %v1005 = vpop.f32.mrf.mxu0
  %1006 = vmatprep.mubr.bf16.mxu0 0
  %1007 = vmatmul.mubr.bf16.gmra.mxu0 %v914
  %v1008 = vpop.f32.mrf.mxu0
  %v1009 = vadd.f32 0.0, %v1008
  %v1010 = vpop.f32.mrf.mxu0
  %v1011 = vpop.f32.mrf.mxu0
  %v1012 = vadd.f32 0.0, %v1011
  %v1013 = vpop.f32.mrf.mxu0
  %1014 = vmatprep.mubr.bf16.mxu0 0
  %1015 = vmatmul.mubr.bf16.gmra.mxu0 %v913
  %v1016 = vpop.f32.mrf.mxu0
  %v1017 = vadd.f32 0.0, %v1016
  %v1018 = vpop.f32.mrf.mxu0
  %v1019 = vpop.f32.mrf.mxu0
  %v1020 = vpop.f32.mrf.mxu0
  %1021 = vdwg.mxu0
  %v1022 = vadd.f32 %v868, %v1001
  %v1023 = vadd.f32 %v871, %v1004
  %v1024 = vadd.f32 %v876, %v1009
  %v1025 = vadd.f32 %v879, %v1012
  %v1026 = vadd.f32 %v884, %v1017
  %v1027 = vld [vmem:[%s4] sm:$0x1]
  %v1029 = vlaneseq
  %v1030 = vshrl.u32 %v1029, 7
  %v1031 = vsub.s32 0, %v1030
  %v1032 = vrot.slane %v1027, %v1031
  %v1034 = vadd.f32 %v1022, %v1032
  %v1035 = vadd.f32 %v1023, %v1032
  %v1036 = vadd.f32 %v1024, %v1032
  %v1037 = vadd.f32 %v1025, %v1032
  %v1038 = vadd.f32 %v1026, %v1032
  %vm1039 = vcmp.ge.f32.partialorder %v1034, 0.0
  %vm1040 = vcmp.ge.f32.partialorder %v1035, 0.0
  %vm1041 = vcmp.ge.f32.partialorder %v1036, 0.0
  %vm1042 = vcmp.ge.f32.partialorder %v1037, 0.0
  %vm1043 = vcmp.ge.f32.partialorder %v1038, 0.0
  %v1044 = vmul.f32 %v1034, 0.01
  %v1045 = vmul.f32 %v1035, 0.01
  %v1046 = vmul.f32 %v1036, 0.01
  %v1047 = vmul.f32 %v1037, 0.01
  %v1048 = vmul.f32 %v1038, 0.01
  %v1049 = vsel %vm1039, %v1034, %v1044
  %v1050 = vsel %vm1040, %v1035, %v1045
  %v1051 = vsel %vm1041, %v1036, %v1046
  %v1052 = vsel %vm1042, %v1037, %v1047
  %v1053 = vsel %vm1043, %v1038, %v1048
  %1054 = vst [vmem:[%s5] sm:$0xff] %v1049
  %1055 = vst [vmem:[%s5 + $0x8] sm:$0xff] %v1050
  %s1056 = scalar_lea.vmem %s5, 16
  %1057 = vst [vmem:[%s1056 - $0x2] sm:$0xfc] %v1051
  %1058 = vst [vmem:[%s1056 + $0x6] sm:$0xff] %v1052
  %1059 = vst [vmem:[%s1056 + $0xe] sm:$0x3] %v1053
  // Predicated region
  $region22: #{group9_forward.1} parent=0 // pred_check
    _
  $region23: #{group9_forward.1} parent=0 // pred_check_branch
    %1061 = sbr.rel (0) target = $region25
  $region24: #{group9_forward.1} parent=0 // pred_region
    _
  $region25: #{group9_forward.1} parent=0 // pred_fallthru
    _
  // Predicated region
  $region26: #{group9_forward.1} parent=0 // pred_check
    _
  $region27: #{group9_forward.1} parent=0 // pred_check_branch
    %1063 = sbr.rel (0) target = $region29
  $region28: #{group9_forward.1} parent=0 // pred_region
    _
  $region29: #{group9_forward.1} parent=0 // pred_fallthru
    _

</llo_original>
